<compile_context>
chip_gen: v5e
topology: v5e:2x2
jax: 0.10.0
libtpu: 0.0.40
codegen_flags: <defaults>
</compile_context>

<pallas_src>
import numpy as np
import jax
import jax.numpy as jnp
from jax.experimental import pallas as pl
from jax.experimental.pallas import tpu as pltpu


def _round_up(x, m):
    return ((x + m - 1) // m) * m


# ----------------------------------------------------------------------------
# Glue: build the (exact) PyTorch-semantics spatial operators as matrices.
# ----------------------------------------------------------------------------
def adaptive_avg_pool_matrix(H, W, s):
    """(s*s, H*W) matrix reproducing nn.AdaptiveAvgPool2d((s, s))."""
    P = np.zeros((s * s, H * W), np.float32)
    for oh in range(s):
        h0 = (oh * H) // s
        h1 = ((oh + 1) * H + s - 1) // s  # ceil
        for ow in range(s):
            w0 = (ow * W) // s
            w1 = ((ow + 1) * W + s - 1) // s
            area = float((h1 - h0) * (w1 - w0))
            for h in range(h0, h1):
                for w in range(w0, w1):
                    P[oh * s + ow, h * W + w] = 1.0 / area
    return P


def bilinear_matrix_1d(out_size, in_size):
    """(out_size, in_size) matrix reproducing 1-D bilinear, align_corners=False."""
    A = np.zeros((out_size, in_size), np.float32)
    scale = in_size / out_size
    for o in range(out_size):
        src = (o + 0.5) * scale - 0.5
        if src < 0.0:
            src = 0.0
        i0 = int(np.floor(src))
        i0 = min(i0, in_size - 1)
        i1 = min(i0 + 1, in_size - 1)
        frac = src - i0
        A[o, i0] += 1.0 - frac
        A[o, i1] += frac
    return A


def bilinear_upsample_matrix(H, W, s):
    """(H*W, s*s) matrix reproducing F.interpolate(..., mode='bilinear')."""
    Ah = bilinear_matrix_1d(H, s)  # (H, s)
    Aw = bilinear_matrix_1d(W, s)  # (W, s)
    return np.kron(Ah, Aw).astype(np.float32)  # row-major (h, w) flattening


# ----------------------------------------------------------------------------
# Pallas kernel: one (HW-tile, batch) grid step; two bf16 MXU dots with f32
# accumulation, ReLU, lane-dense f32 store.  Bias is pre-folded into U / r.
# ----------------------------------------------------------------------------
def _psp_kernel(x_ref, u_ref, r_ref, wx_ref, o_ref):
    # x_ref : (1, tile, Cin_p)  bf16   streamed per grid step
    # u_ref : (tile, S_p)       bf16   merged upsample rows (+ ones column)
    # r_ref : (1, S_p, Cout_p)  bf16   per-batch pooled results (+ bias row)
    # wx_ref: (Cin_p, Cout_p)   bf16   bottleneck block for raw-x channels
    acc = jnp.dot(x_ref[0], wx_ref[...], preferred_element_type=jnp.float32)
    acc = acc + jnp.dot(u_ref[...], r_ref[0], preferred_element_type=jnp.float32)
    o_ref[0] = jnp.maximum(acc, 0.0).astype(o_ref.dtype)


def _vmem_limit_bytes():
    """Generation-aware VMEM limit: 3/4 of physical (128 MiB v5e/v6e, 64 MiB v7x)."""
    try:
        cap = pltpu.get_tpu_info().vmem_capacity_bytes
    except Exception:
        cap = 128 * 1024 * 1024
    return int(min(96 * 1024 * 1024, cap * 3 // 4))


def _pad_cast(a, shape, dtype):
    """Cast to dtype and zero-pad up to `shape`; no copy when already aligned."""
    a = a.astype(dtype)
    if tuple(a.shape) == tuple(shape):
        return a
    pads = [(0, t - s) for s, t in zip(a.shape, shape)]
    return jnp.pad(a, pads)


def pyramid_pooler_pallas(x_nchw, params, *, tile_hw=1024, nchw_out=True):
    """x_nchw: (B, Cin, H, W) float32 -> (B, Cout, H, W) float32."""
    B, Cin, H, W = x_nchw.shape
    HW = H * W
    Cout = params["wx"].shape[1]

    # One transpose of x feeds both the pooling pre-pass and the kernel input.
    x = jnp.transpose(x_nchw, (0, 2, 3, 1)).reshape(B, HW, Cin)        # f32

    # ---- hoisted pre-pass (plain JAX, <1% of FLOPs; kept in f32) -----------
    # One concatenated pooling matmul, then per branch the folded channel
    # matmul M_s = Wm_s @ WB_s:   r_s[b] = (P_s @ x[b]) @ M_s.
    P_all = jnp.concatenate([P for (P, U, Wm, WB) in params["branches"]], axis=0)
    U_all = jnp.concatenate([U for (P, U, Wm, WB) in params["branches"]], axis=1)
    pooled = jnp.einsum("sh,bhc->bsc", P_all, x)                       # (B, S, Cin)
    r_blocks, off = [], 0
    for (P, U, Wm, WB) in params["branches"]:
        s2 = P.shape[0]
        M = jnp.dot(Wm, WB)                                            # (Cin, Cout)
        r_blocks.append(jnp.einsum("bsc,co->bso", pooled[:, off:off + s2], M))
        off += s2
    r_all = jnp.concatenate(r_blocks, axis=1)                          # (B, S, Cout)

    # Fold the bias into the small dot: ones column in U, bias row in r.
    S_aug = U_all.shape[1] + 1                                         # 1+4+9+36+1 = 51
    U_aug = jnp.concatenate([U_all, jnp.ones((HW, 1), jnp.float32)], axis=1)
    r_aug = jnp.concatenate(
        [r_all, jnp.broadcast_to(params["bias"][None, :, :], (B, 1, Cout))], axis=1)

    # ---- padding / tiling (bf16 operands => sublane multiples of 16) -------
    Cin_p = _round_up(Cin, 256 if Cin >= 256 else 128)
    Cout_p = _round_up(Cout, 256 if Cout >= 256 else 128)
    S_p = _round_up(S_aug, 16)

    tile = _round_up(max(16, min(tile_hw, _round_up(HW, 16))), 16)
    # v7x has two TensorCores sharing the parallel grid: keep the product even.
    if (B * (-(-HW // tile))) % 2 == 1 and tile % 32 == 0:
        tile //= 2
    HW_p = _round_up(HW, tile)

    bf16 = jnp.bfloat16
    x_p = _pad_cast(x, (B, HW_p, Cin_p), bf16)
    u_p = _pad_cast(U_aug, (HW_p, S_p), bf16)
    r_p = _pad_cast(r_aug, (B, S_p, Cout_p), bf16)
    wx_p = _pad_cast(params["wx"], (Cin_p, Cout_p), bf16)

    # Batch is the innermost grid axis: the U tile stays resident across it.
    grid = (HW_p // tile, B)

    out = pl.pallas_call(
        _psp_kernel,
        out_shape=jax.ShapeDtypeStruct((B, HW_p, Cout_p), jnp.float32),
        grid_spec=pltpu.PrefetchScalarGridSpec(
            num_scalar_prefetch=0,
            grid=grid,
            in_specs=[
                pl.BlockSpec((1, tile, Cin_p), lambda t, b: (b, t, 0)),   # x (streamed)
                pl.BlockSpec((tile, S_p), lambda t, b: (t, 0)),           # U (outer-axis resident)
                # r changes on the inner batch axis and is tiny -> default buffering.
                pl.BlockSpec((1, S_p, Cout_p), lambda t, b: (b, 0, 0)),
                # wx is grid-invariant: single-buffer to free VMEM for bigger tiles.
                pl.BlockSpec((Cin_p, Cout_p), lambda t, b: (0, 0),
                             pipeline_mode=pl.Buffered(1)),
            ],
            out_specs=pl.BlockSpec((1, tile, Cout_p), lambda t, b: (b, t, 0)),
        ),
        compiler_params=pltpu.CompilerParams(
            dimension_semantics=("parallel", "parallel"),
            vmem_limit_bytes=_vmem_limit_bytes(),
        ),
    )(x_p, u_p, r_p, wx_p)

    # Slice padding only if any was added; transpose back to NCHW only if the
    # consumer needs it (set nchw_out=False for channels-last consumers).
    if HW_p != HW or Cout_p != Cout:
        out = out[:, :HW, :Cout]
    out = out.reshape(B, H, W, Cout)
    if not nchw_out:
        return out
    return jnp.transpose(out, (0, 3, 1, 2))


# ----------------------------------------------------------------------------
# Pure-JAX reference (un-folded original decomposition, f32) for sanity check.
# ----------------------------------------------------------------------------
def pyramid_pooler_ref(x_nchw, params):
    B, Cin, H, W = x_nchw.shape
    x = jnp.transpose(x_nchw, (0, 2, 3, 1)).reshape(B, H * W, Cin)
    acc = jnp.einsum("bhc,co->bho", x, params["wx"]) + params["bias"]
    for (P, U, Wm, WB) in params["branches"]:
        pooled = jnp.einsum("sh,bhc->bsc", P, x)
        mid = jnp.einsum("bsc,cm->bsm", pooled, Wm)
        up = jnp.einsum("hs,bsm->bhm", U, mid)
        acc = acc + jnp.einsum("bhm,mo->bho", up, WB)
    out = jnp.maximum(acc, 0.0)
    Cout = params["wx"].shape[1]
    return jnp.transpose(out.reshape(B, H, W, Cout), (0, 3, 1, 2))


# ----------------------------------------------------------------------------
# Deterministic synthetic parameter init (shapes from PyramidPooler.__init__).
# ----------------------------------------------------------------------------
def make_params(key, infeats, H, W, pool_sizes=(1, 2, 3, 6), outfeats=None,
                intermediate_feats=None):
    if outfeats is None:
        outfeats = infeats
    if intermediate_feats is None:
        intermediate_feats = infeats // len(pool_sizes)
    Cmid, Cout = intermediate_feats, outfeats
    Ctotal = infeats + Cmid * len(pool_sizes)

    keys = jax.random.split(key, len(pool_sizes) + 2)
    # bottleneck: torch weight (Cout, Ctotal, 1, 1) + bias (Cout,) -> our (Ctotal, Cout)
    wb_full = 0.1 * jax.random.normal(keys[-2], (Ctotal, Cout), jnp.float32)
    bias = 0.1 * jax.random.normal(keys[-1], (1, Cout), jnp.float32)

    branches = []
    for i, s in enumerate(pool_sizes):
        P = jnp.asarray(adaptive_avg_pool_matrix(H, W, s))
        U = jnp.asarray(bilinear_upsample_matrix(H, W, s))
        # branch 1x1 conv (no bias): torch (Cmid, Cin, 1, 1) -> our (Cin, Cmid)
        Wm = 0.1 * jax.random.normal(keys[i], (infeats, Cmid), jnp.float32)
        WB = wb_full[i * Cmid:(i + 1) * Cmid, :]  # bottleneck block for this branch
        branches.append((P, U, Wm, WB))

    wx = wb_full[len(pool_sizes) * Cmid:, :]  # bottleneck block for the raw-x channels
    return {"branches": branches, "wx": wx, "bias": bias}


if __name__ == "__main__":
    # TODO(synk): the ResNet backbone / UHead / NumberHead parts of UNumPSP are
    # standard conv stacks left to XLA; this script covers the PyramidPooler stage.
    B, Cin, H, W = 2, 4, 16, 16
    key = jax.random.PRNGKey(0)
    k_x, k_p = jax.random.split(key)

    x = jax.random.normal(k_x, (B, Cin, H, W), jnp.float32)
    params = make_params(k_p, Cin, H, W)

    # small tile so the (HW/tile, B) grid actually has multiple HW tiles at toy size;
    # jit so the wrapper's transpose / pad / cast fuse into single HBM passes.
    fwd = jax.jit(lambda v: pyramid_pooler_pallas(v, params, tile_hw=128))
    out = jax.block_until_ready(fwd(x))

    ref = jax.block_until_ready(pyramid_pooler_ref(x, params))
    assert out.shape == (B, Cin, H, W)
    # bf16 MXU operands with f32 accumulation -> loosened tolerance
    assert bool(jnp.allclose(out, ref, rtol=3e-2, atol=3e-2)), "mismatch vs reference"

    print("KERNEL_OK")
</pallas_src>

<mosaic_0001>
module attributes {stable_mosaic.version = 11 : i64} {
  func.func @_psp_kernel(%arg0: i32, %arg1: i32, %arg2: memref<1x128x128xbf16, #tpu.memory_space<vmem>>, %arg3: memref<128x64xbf16, #tpu.memory_space<vmem>>, %arg4: memref<1x64x128xbf16, #tpu.memory_space<vmem>>, %arg5: memref<128x128xbf16, #tpu.memory_space<vmem>>, %arg6: memref<1x128x128xf32, #tpu.memory_space<vmem>>) attributes {dimension_semantics = [#tpu.dimension_semantics<parallel>, #tpu.dimension_semantics<parallel>], iteration_bounds = array<i64: 2, 2>, scalar_prefetch = 0 : i64, scratch_operands = 0 : i64, tpu.core_type = #tpu.core_type<tc>, window_params = [{transform_indices = @transform_0, window_bounds = array<i64: 1, 128, 128>}, {transform_indices = @transform_1, window_bounds = array<i64: 128, 64>}, {transform_indices = @transform_2, window_bounds = array<i64: 1, 64, 128>}, {pipeline_mode = #tpu.pipeline_mode<synchronous>, transform_indices = @transform_3, window_bounds = array<i64: 128, 128>}, {transform_indices = @transform_4, window_bounds = array<i64: 1, 128, 128>}]} {
    %c0 = arith.constant 0 : index
    %c0_0 = arith.constant 0 : index
    %c0_1 = arith.constant 0 : index
    %0 = vector.load %arg2[%c0, %c0_0, %c0_1] : memref<1x128x128xbf16, #tpu.memory_space<vmem>>, vector<1x128x128xbf16>
    %1 = vector.shape_cast %0 : vector<1x128x128xbf16> to vector<128x128xbf16>
    %c0_2 = arith.constant 0 : index
    %c0_3 = arith.constant 0 : index
    %2 = vector.load %arg5[%c0_2, %c0_3] : memref<128x128xbf16, #tpu.memory_space<vmem>>, vector<128x128xbf16>
    %cst = arith.constant dense<0.000000e+00> : vector<128x128xf32>
    %3 = tpu.matmul %1, %2, %cst {dimension_numbers = #tpu.dot_dimension_numbers<[1], [0], [0], [1], [0, 0, 1, 1], [], []>} : vector<128x128xbf16>, vector<128x128xbf16>, vector<128x128xf32> -> vector<128x128xf32>
    %c0_4 = arith.constant 0 : index
    %c0_5 = arith.constant 0 : index
    %4 = vector.load %arg3[%c0_4, %c0_5] : memref<128x64xbf16, #tpu.memory_space<vmem>>, vector<128x64xbf16>
    %c0_6 = arith.constant 0 : index
    %c0_7 = arith.constant 0 : index
    %c0_8 = arith.constant 0 : index
    %5 = vector.load %arg4[%c0_6, %c0_7, %c0_8] : memref<1x64x128xbf16, #tpu.memory_space<vmem>>, vector<1x64x128xbf16>
    %6 = vector.shape_cast %5 : vector<1x64x128xbf16> to vector<64x128xbf16>
    %cst_9 = arith.constant dense<0.000000e+00> : vector<128x128xf32>
    %7 = tpu.matmul %4, %6, %cst_9 {dimension_numbers = #tpu.dot_dimension_numbers<[1], [0], [0], [1], [0, 0, 1, 1], [], []>} : vector<128x64xbf16>, vector<64x128xbf16>, vector<128x128xf32> -> vector<128x128xf32>
    %8 = arith.addf %3, %7 : vector<128x128xf32>
    %cst_10 = arith.constant 0.000000e+00 : f32
    %9 = vector.broadcast %cst_10 : f32 to vector<128x128xf32>
    %10 = arith.maximumf %8, %9 : vector<128x128xf32>
    %c0_11 = arith.constant 0 : index
    %c0_12 = arith.constant 0 : index
    %c0_13 = arith.constant 0 : index
    %11 = vector.load %arg6[%c0_11, %c0_12, %c0_13] : memref<1x128x128xf32, #tpu.memory_space<vmem>>, vector<1x128x128xf32>
    %12 = vector.shape_cast %11 : vector<1x128x128xf32> to vector<128x128xf32>
    %13 = vector.shape_cast %10 : vector<128x128xf32> to vector<1x128x128xf32>
    tpu.vector_store %arg6[%c0_11, %c0_12, %c0_13], %13 {strides = array<i32>} : memref<1x128x128xf32, #tpu.memory_space<vmem>>, vector<1x128x128xf32>,
    return
  }
  func.func @transform_0(%arg0: i32, %arg1: i32) -> (i32, i32, i32) {
    %c0_i32 = arith.constant 0 : i32
    %c0_i32_0 = arith.constant 0 : i32
    return %arg1, %arg0, %c0_i32 : i32, i32, i32
  }
  func.func @transform_1(%arg0: i32, %arg1: i32) -> (i32, i32) {
    %c0_i32 = arith.constant 0 : i32
    %c0_i32_0 = arith.constant 0 : i32
    return %arg0, %c0_i32 : i32, i32
  }
  func.func @transform_2(%arg0: i32, %arg1: i32) -> (i32, i32, i32) {
    %c0_i32 = arith.constant 0 : i32
    %c0_i32_0 = arith.constant 0 : i32
    %c0_i32_1 = arith.constant 0 : i32
    return %arg1, %c0_i32, %c0_i32_0 : i32, i32, i32
  }
  func.func @transform_3(%arg0: i32, %arg1: i32) -> (i32, i32) {
    %c0_i32 = arith.constant 0 : i32
    %c0_i32_0 = arith.constant 0 : i32
    %c0_i32_1 = arith.constant 0 : i32
    return %c0_i32, %c0_i32_0 : i32, i32
  }
  func.func @transform_4(%arg0: i32, %arg1: i32) -> (i32, i32, i32) {
    %c0_i32 = arith.constant 0 : i32
    %c0_i32_0 = arith.constant 0 : i32
    return %arg1, %arg0, %c0_i32 : i32, i32, i32
  }
}

</mosaic_0001>

<llo_original>
// kernel: _lambda_.1
$region0: #{_lambda_.1}
  #allocation0 [shape = 'u32[]', space=smem, size = 0x4, offset = 0x4, fixed_abs, tag = 'smem constant byte address 0x4 - core index']
  #allocation1 [shape = 'u32[72,128]{1,0:T(1,128)}', space=vmem, size = 0x9000, scoped, tag = 'internal scratch']
  %s0 = inlined_call_operand.vmem [shape: bf16[2,256,128], index: 0, kind: input, shape index: {}]
  %s1 = inlined_call_operand.vmem [shape: bf16[256,64], index: 1, kind: input, shape index: {}]
  %s2 = inlined_call_operand.vmem [shape: bf16[2,64,128], index: 2, kind: input, shape index: {}]
  %s3 = inlined_call_operand.vmem [shape: bf16[128,128], index: 3, kind: input, shape index: {}]
  %s4 = inlined_call_operand.vmem [shape: f32[2,256,128], index: 4, kind: output, shape index: {}]
  %s5 = sld [smem:[#allocation0]]
  $region49: #{_lambda_.1} parent=0
    _
  %s7 = ssub.s32 1, %s5
  %s8 = scalar_select 0, %s7, %s5
  loop: start=0, step=1, limit=6
  $region2: #{_lambda_.1} parent=0 // loop_pre_header
    _
  $region3: #{_lambda_.1} parent=0 // loop_header
    %s10 = sphi 0, %s14
    %p11 = scmp.ge.s32.totalorder %s10, 6
    %s17 = sphi 0, %s29
    %s18 = sphi 0, %s25
    %s19 = sphi 0, %s17
    %s20 = sphi 0, %s18
    %s21 = sphi 0, %s19
    %s22 = sphi 0, %s20
    %s34 = sphi 0, %s36
    %s37 = sphi 0, %s34
    %s38 = sphi 0, %s37
    %s54 = sphi 0, %s38
    %s60 = sphi 0, %s62
    %s63 = sphi 0, %s60
    %s64 = sphi 0, %s63
    %s80 = sphi 0, %s64
    %s86 = sphi 0, %s88
    %s89 = sphi 0, %s86
    %s90 = sphi 0, %s89
    %s106 = sphi 0, %s90
    %s110 = sphi 0, %s110
    %s112 = sphi 0, %s110
    %s113 = sphi 0, %s112
    %s127 = sphi 0, %s113
    %s135 = sphi 0, %s137
    %s138 = sphi 0, %s135
    %s139 = sphi 0, %s138
    %s155 = sphi 0, %s139
  $region4: #{_lambda_.1} parent=0 // loop_header_branch
    %13 = sbr.rel (%p11) target = $region8
  $region5: #{_lambda_.1} parent=0 // loop_body
    %s15 = ssub.s32 %s10, 1
    %s16 = ssub.s32 %s10, 2
    %s23 = sadd.s32 1, %s18
    %p24 = scmp.ge.s32.totalorder %s23, 2
    %s25 = scalar_select %p24, 0, %s23
    %s26 = sadd.s32 1, %s17
    %s27 = scalar_select %p24, %s26, %s17
    %p28 = scmp.ge.s32.totalorder %s27, 2
    %s29 = scalar_select %p28, 0, %s27
    %s30 = ssub.s32 %s18, %s25
    %s31 = ssub.s32 %s17, %s29
    %s32 = sor.u32 %s30, %s31
    %p33 = scmp.eq.s32.totalorder %s32, 0
    %s35 = sadd.s32 %s34, 1
    %s36 = scalar_select %p33, %s34, %s35
    %p39 = pneg %p33
    %p40 = scmp.eq.s32.totalorder %s10, 3
    %p41 = por %p39, %p40
    %p42 = scmp.ne.s32.totalorder %s34, %s37
    %p43 = scmp.eq.s32.totalorder %s10, 0
    %p44 = por %p42, %p43
    %p45 = scmp.ne.s32.totalorder %s34, %s37
    %p46 = scmp.eq.s32.totalorder %s15, 3
    %p47 = por %p45, %p46
    %p48 = scmp.ne.s32.totalorder %s37, %s38
    %p49 = scmp.eq.s32.totalorder %s15, 0
    %p50 = por %p48, %p49
    %p51 = scmp.ne.s32.totalorder %s37, %s38
    %p52 = scmp.eq.s32.totalorder %s16, 3
    %p53 = por %p51, %p52
    %p55 = scmp.ne.s32.totalorder %s38, %s54
    %p56 = scmp.eq.s32.totalorder %s16, 0
    %p57 = por %p55, %p56
    %s58 = ssub.s32 %s17, %s29
    %p59 = scmp.eq.s32.totalorder %s58, 0
    %s61 = sadd.s32 %s60, 1
    %s62 = scalar_select %p59, %s60, %s61
    %p65 = pneg %p59
    %p66 = scmp.eq.s32.totalorder %s10, 3
    %p67 = por %p65, %p66
    %p68 = scmp.ne.s32.totalorder %s60, %s63
    %p69 = scmp.eq.s32.totalorder %s10, 0
    %p70 = por %p68, %p69
    %p71 = scmp.ne.s32.totalorder %s60, %s63
    %p72 = scmp.eq.s32.totalorder %s15, 3
    %p73 = por %p71, %p72
    %p74 = scmp.ne.s32.totalorder %s63, %s64
    %p75 = scmp.eq.s32.totalorder %s15, 0
    %p76 = por %p74, %p75
    %p77 = scmp.ne.s32.totalorder %s63, %s64
    %p78 = scmp.eq.s32.totalorder %s16, 3
    %p79 = por %p77, %p78
    %p81 = scmp.ne.s32.totalorder %s64, %s80
    %p82 = scmp.eq.s32.totalorder %s16, 0
    %p83 = por %p81, %p82
    %s84 = ssub.s32 %s18, %s25
    %p85 = scmp.eq.s32.totalorder %s84, 0
    %s87 = sadd.s32 %s86, 1
    %s88 = scalar_select %p85, %s86, %s87
    %p91 = pneg %p85
    %p92 = scmp.eq.s32.totalorder %s10, 3
    %p93 = por %p91, %p92
    %p94 = scmp.ne.s32.totalorder %s86, %s89
    %p95 = scmp.eq.s32.totalorder %s10, 0
    %p96 = por %p94, %p95
    %p97 = scmp.ne.s32.totalorder %s86, %s89
    %p98 = scmp.eq.s32.totalorder %s15, 3
    %p99 = por %p97, %p98
    %p100 = scmp.ne.s32.totalorder %s89, %s90
    %p101 = scmp.eq.s32.totalorder %s15, 0
    %p102 = por %p100, %p101
    %p103 = scmp.ne.s32.totalorder %s89, %s90
    %p104 = scmp.eq.s32.totalorder %s16, 3
    %p105 = por %p103, %p104
    %p107 = scmp.ne.s32.totalorder %s90, %s106
    %p108 = scmp.eq.s32.totalorder %s16, 0
    %p109 = por %p107, %p108
    %s111 = sadd.s32 %s110, 1
    %p114 = scmp.eq.s32.totalorder %s10, 3
    %p115 = scmp.ne.s32.totalorder %s110, %s112
    %p116 = scmp.eq.s32.totalorder %s10, 0
    %p117 = por %p115, %p116
    %p118 = scmp.ne.s32.totalorder %s110, %s112
    %p119 = scmp.eq.s32.totalorder %s15, 3
    %p120 = por %p118, %p119
    %p121 = scmp.ne.s32.totalorder %s112, %s113
    %p122 = scmp.eq.s32.totalorder %s15, 0
    %p123 = por %p121, %p122
    %p124 = scmp.ne.s32.totalorder %s112, %s113
    %p125 = scmp.eq.s32.totalorder %s16, 3
    %p126 = por %p124, %p125
    %p128 = scmp.ne.s32.totalorder %s113, %s127
    %p129 = scmp.eq.s32.totalorder %s16, 0
    %p130 = por %p128, %p129
    %s131 = ssub.s32 %s18, %s25
    %s132 = ssub.s32 %s17, %s29
    %s133 = sor.u32 %s131, %s132
    %p134 = scmp.eq.s32.totalorder %s133, 0
    %s136 = sadd.s32 %s135, 1
    %s137 = scalar_select %p134, %s135, %s136
    %p140 = pneg %p134
    %p141 = scmp.eq.s32.totalorder %s10, 3
    %p142 = por %p140, %p141
    %p143 = scmp.ne.s32.totalorder %s135, %s138
    %p144 = scmp.eq.s32.totalorder %s10, 0
    %p145 = por %p143, %p144
    %p146 = scmp.ne.s32.totalorder %s135, %s138
    %p147 = scmp.eq.s32.totalorder %s15, 3
    %p148 = por %p146, %p147
    %p149 = scmp.ne.s32.totalorder %s138, %s139
    %p150 = scmp.eq.s32.totalorder %s15, 0
    %p151 = por %p149, %p150
    %p152 = scmp.ne.s32.totalorder %s138, %s139
    %p153 = scmp.eq.s32.totalorder %s16, 3
    %p154 = por %p152, %p153
    %p156 = scmp.ne.s32.totalorder %s139, %s155
    %p157 = scmp.eq.s32.totalorder %s16, 0
    %p158 = por %p156, %p157
    %p159 = scmp.le.s32.totalorder 1, %s10
    %p160 = scmp.lt.s32.totalorder %s10, 5
    %p161 = pnand %p159, %p160
    %p162 = pneg %p161
    // Predicated region
    $region9: #{_lambda_.1} parent=5 // pred_check
      _
    $region10: #{_lambda_.1} parent=5 // pred_check_branch
      %164 = sbr.rel (%p161) target = $region12
    $region11: #{_lambda_.1} parent=5 // pred_region
      %s165 = ssub.s32 %s10, 1
      // Predicated region
      $region13: #{_lambda_.1} parent=11 // pred_check
        %p166 = pneg %p123
      $region14: #{_lambda_.1} parent=11 // pred_check_branch
        %168 = sbr.rel (%p166) target = $region16
      $region15: #{_lambda_.1} parent=11 // pred_region
        _
      $region16: #{_lambda_.1} parent=11 // pred_fallthru
        _
    $region12: #{_lambda_.1} parent=5 // pred_fallthru
      _
    %p169 = scmp.lt.s32.totalorder %s10, 4
    // Predicated region
    $region17: #{_lambda_.1} parent=5 // pred_check
      %p170 = pneg %p169
    $region18: #{_lambda_.1} parent=5 // pred_check_branch
      %172 = sbr.rel (%p170) target = $region20
    $region19: #{_lambda_.1} parent=5 // pred_region
      // Predicated region
      $region21: #{_lambda_.1} parent=19 // pred_check
        %p173 = pneg %p44
      $region22: #{_lambda_.1} parent=19 // pred_check_branch
        %175 = sbr.rel (%p173) target = $region24
      $region23: #{_lambda_.1} parent=19 // pred_region
        %s176 = smul.u32 16, %s17
        %p177 = scmp.lt.s32.totalorder %s18, 1
        %s178 = scalar_select %p177, %s18, 1
        %p179 = scmp.lt.s32.totalorder %s176, 31
        %s180 = scalar_select %p179, %s176, 31
        %s181 = smul.addr %s178, 32
        %s182 = sadd.s32 %s180, %s181
        %s183 = smul.addr %s182, 4
        %s184 = scalar_lea.vmem %s0, %s183
        %s185 = smul.u32 16, %s17
      $region24: #{_lambda_.1} parent=19 // pred_fallthru
        _
      // Predicated region
      $region25: #{_lambda_.1} parent=19 // pred_check
        %p186 = pneg %p70
      $region26: #{_lambda_.1} parent=19 // pred_check_branch
        %188 = sbr.rel (%p186) target = $region28
      $region27: #{_lambda_.1} parent=19 // pred_region
        %s189 = smul.u32 16, %s17
        %p190 = scmp.lt.s32.totalorder %s189, 31
        %s191 = scalar_select %p190, %s189, 31
        %s192 = smul.addr %s191, 4
        %s193 = scalar_lea.vmem %s1, %s192
        %s194 = smul.u32 16, %s17
      $region28: #{_lambda_.1} parent=19 // pred_fallthru
        _
      // Predicated region
      $region29: #{_lambda_.1} parent=19 // pred_check
        %p195 = pneg %p96
      $region30: #{_lambda_.1} parent=19 // pred_check_branch
        %197 = sbr.rel (%p195) target = $region32
      $region31: #{_lambda_.1} parent=19 // pred_region
        %p198 = scmp.lt.s32.totalorder %s18, 1
        %s199 = scalar_select %p198, %s18, 1
        %s200 = smul.addr %s199, 8
        %s201 = smul.addr %s200, 4
        %s202 = scalar_lea.vmem %s2, %s201
      $region32: #{_lambda_.1} parent=19 // pred_fallthru
        _
    $region20: #{_lambda_.1} parent=5 // pred_fallthru
      _
    %p203 = scmp.le.s32.totalorder 1, %s10
    %p204 = scmp.lt.s32.totalorder %s10, 5
    %p205 = pnand %p203, %p204
    %p206 = pneg %p205
    // Predicated region
    $region33: #{_lambda_.1} parent=5 // pred_check
      _
    $region34: #{_lambda_.1} parent=5 // pred_check_branch
      %208 = sbr.rel (%p205) target = $region36
    $region35: #{_lambda_.1} parent=5 // pred_region
      %s209 = ssub.s32 %s10, 1
      %s210 = smul.u32 16, %s19
      %p211 = scmp.lt.s32.totalorder %s20, 1
      %s212 = scalar_select %p211, %s20, 1
      %p213 = scmp.lt.s32.totalorder %s210, 31
      %s214 = scalar_select %p213, %s210, 31
      %s215 = smul.addr %s212, 32
      %s216 = sadd.s32 %s214, %s215
      %s217 = smul.addr %s216, 4
      %s218 = scalar_lea.vmem %s0, %s217
      %p219 = pneg %p50
      %p220 = pneg %p47
      %s221 = smul.u32 16, %s19
      %p222 = scmp.lt.s32.totalorder %s221, 31
      %s223 = scalar_select %p222, %s221, 31
      %s224 = smul.addr %s223, 4
      %s225 = scalar_lea.vmem %s1, %s224
      %p226 = pneg %p76
      %p227 = pneg %p73
      %p228 = scmp.lt.s32.totalorder %s20, 1
      %s229 = scalar_select %p228, %s20, 1
      %s230 = smul.addr %s229, 8
      %s231 = smul.addr %s230, 4
      %s232 = scalar_lea.vmem %s2, %s231
      %p233 = pneg %p102
      %p234 = pneg %p99
      %p235 = pneg %p123
      %p236 = pneg %p120
      %p237 = pneg %p151
      %p238 = pneg %p148
      %s239 = smul.u32 16, %s19
      %p240 = scmp.lt.s32.totalorder %s20, 1
      %s241 = scalar_select %p240, %s20, 1
      %p242 = scmp.lt.s32.totalorder %s239, 31
      %s243 = scalar_select %p242, %s239, 31
      %s244 = smul.addr %s241, 32
      %s245 = sadd.s32 %s243, %s244
      %s246 = smul.addr %s245, 8
      %s247 = scalar_lea.vmem %s4, %s246
      %s248 = smul.u32 16, %s19
      %p249 = scmp.lt.s32.totalorder %s20, 1
      %s250 = scalar_select %p249, %s20, 1
      %p251 = scmp.lt.s32.totalorder %s248, 31
      %s252 = scalar_select %p251, %s248, 31
      %s253 = smul.addr %s250, 32
      %s254 = sadd.s32 %s252, %s253
      %s255 = smul.addr %s254, 4
      %s256 = scalar_lea.vmem %s0, %s255
      %s257 = smul.u32 16, %s19
      %s258 = smul.u32 16, %s19
      %p259 = scmp.lt.s32.totalorder %s258, 31
      %s260 = scalar_select %p259, %s258, 31
      %s261 = smul.addr %s260, 4
      %s262 = scalar_lea.vmem %s1, %s261
      %s263 = smul.u32 16, %s19
      %p264 = scmp.lt.s32.totalorder %s20, 1
      %s265 = scalar_select %p264, %s20, 1
      %s266 = smul.addr %s265, 8
      %s267 = smul.addr %s266, 4
      %s268 = scalar_lea.vmem %s2, %s267
      %s269 = smul.u32 16, %s19
      %p270 = scmp.lt.s32.totalorder %s20, 1
      %s271 = scalar_select %p270, %s20, 1
      %p272 = scmp.lt.s32.totalorder %s269, 31
      %s273 = scalar_select %p272, %s269, 31
      %s274 = smul.addr %s271, 32
      %s275 = sadd.s32 %s273, %s274
      %s276 = smul.addr %s275, 8
      %s277 = scalar_lea.vmem %s4, %s276
      %s278 = smul.u32 16, %s19
      %v280 = vld [vmem:[%s256] sm:$0xf]
      %v281 = vld [vmem:[%s256 + $0x4] sm:$0xf]
      %v282 = vld [vmem:[%s256 + $0x8] sm:$0xf]
      %v283 = vld [vmem:[%s256 + $0xc] sm:$0xf]
      %v284 = vld [vmem:[%s256 + $0x10] sm:$0xf]
      %v285 = vld [vmem:[%s256 + $0x14] sm:$0xf]
      %v286 = vld [vmem:[%s256 + $0x18] sm:$0xf]
      %v287 = vld [vmem:[%s256 + $0x1c] sm:$0xf]
      %v288 = vld [vmem:[%s256 + $0x20] sm:$0xf]
      %v289 = vld [vmem:[%s256 + $0x24] sm:$0xf]
      %v290 = vld [vmem:[%s256 + $0x28] sm:$0xf]
      %v291 = vld [vmem:[%s256 + $0x2c] sm:$0xf]
      %v292 = vld [vmem:[%s256 + $0x30] sm:$0xf]
      %v293 = vld [vmem:[%s256 + $0x34] sm:$0xf]
      %v294 = vld [vmem:[%s256 + $0x38] sm:$0xf]
      %v295 = vld [vmem:[%s256 + $0x3c] sm:$0xf]
      %v296 = vld [vmem:[%s3] sm:$0xf]
      %v297 = vld [vmem:[%s3 + $0x4] sm:$0xf]
      %v298 = vld [vmem:[%s3 + $0x8] sm:$0xf]
      %v299 = vld [vmem:[%s3 + $0xc] sm:$0xf]
      %v300 = vld [vmem:[%s3 + $0x10] sm:$0xf]
      %v301 = vld [vmem:[%s3 + $0x14] sm:$0xf]
      %v302 = vld [vmem:[%s3 + $0x18] sm:$0xf]
      %v303 = vld [vmem:[%s3 + $0x1c] sm:$0xf]
      %v304 = vld [vmem:[%s3 + $0x20] sm:$0xf]
      %v305 = vld [vmem:[%s3 + $0x24] sm:$0xf]
      %v306 = vld [vmem:[%s3 + $0x28] sm:$0xf]
      %v307 = vld [vmem:[%s3 + $0x2c] sm:$0xf]
      %v308 = vld [vmem:[%s3 + $0x30] sm:$0xf]
      %v309 = vld [vmem:[%s3 + $0x34] sm:$0xf]
      %v310 = vld [vmem:[%s3 + $0x38] sm:$0xf]
      %v311 = vld [vmem:[%s3 + $0x3c] sm:$0xf]
      %v312 = vld [vmem:[%s262] sm:$0xf]
      %v313 = vld [vmem:[%s262 + $0x4] sm:$0xf]
      %v314 = vld [vmem:[%s262 + $0x8] sm:$0xf]
      %v315 = vld [vmem:[%s262 + $0xc] sm:$0xf]
      %v316 = vld [vmem:[%s262 + $0x10] sm:$0xf]
      %v317 = vld [vmem:[%s262 + $0x14] sm:$0xf]
      %v318 = vld [vmem:[%s262 + $0x18] sm:$0xf]
      %v319 = vld [vmem:[%s262 + $0x1c] sm:$0xf]
      %v320 = vld [vmem:[%s262 + $0x20] sm:$0xf]
      %v321 = vld [vmem:[%s262 + $0x24] sm:$0xf]
      %v322 = vld [vmem:[%s262 + $0x28] sm:$0xf]
      %v323 = vld [vmem:[%s262 + $0x2c] sm:$0xf]
      %v324 = vld [vmem:[%s262 + $0x30] sm:$0xf]
      %v325 = vld [vmem:[%s262 + $0x34] sm:$0xf]
      %v326 = vld [vmem:[%s262 + $0x38] sm:$0xf]
      %v327 = vld [vmem:[%s262 + $0x3c] sm:$0xf]
      %v328 = vld [vmem:[%s268] sm:$0xf]
      %v329 = vld [vmem:[%s268 + $0x4] sm:$0xf]
      %v330 = vld [vmem:[%s268 + $0x8] sm:$0xf]
      %v331 = vld [vmem:[%s268 + $0xc] sm:$0xf]
      %v332 = vld [vmem:[%s268 + $0x10] sm:$0xf]
      %v333 = vld [vmem:[%s268 + $0x14] sm:$0xf]
      %v334 = vld [vmem:[%s268 + $0x18] sm:$0xf]
      %v335 = vld [vmem:[%s268 + $0x1c] sm:$0xf]
      %v352 = vunpack.c.l.b16 %v312
      %v353 = vunpack.c.l.b16 %v313
      %v354 = vunpack.c.l.b16 %v314
      %v355 = vunpack.c.l.b16 %v315
      %v356 = vunpack.c.l.b16 %v316
      %v357 = vunpack.c.l.b16 %v317
      %v358 = vunpack.c.l.b16 %v318
      %v359 = vunpack.c.l.b16 %v319
      %v360 = vunpack.c.l.b16 %v320
      %v361 = vunpack.c.l.b16 %v321
      %v362 = vunpack.c.l.b16 %v322
      %v363 = vunpack.c.l.b16 %v323
      %v364 = vunpack.c.l.b16 %v324
      %v365 = vunpack.c.l.b16 %v325
      %v366 = vunpack.c.l.b16 %v326
      %v367 = vunpack.c.l.b16 %v327
      %v368 = vpack.c.b16 %v353, %v352
      %v369 = vpack.c.b16 %v355, %v354
      %v370 = vpack.c.b16 %v357, %v356
      %v371 = vpack.c.b16 %v359, %v358
      %v372 = vpack.c.b16 %v361, %v360
      %v373 = vpack.c.b16 %v363, %v362
      %v374 = vpack.c.b16 %v365, %v364
      %v375 = vpack.c.b16 %v367, %v366
      %v384 = vunpack.c.l.b16 %v328
      %v385 = vunpack.c.l.b16 %v329
      %v386 = vunpack.c.l.b16 %v330
      %v387 = vunpack.c.l.b16 %v331
      %v388 = vunpack.c.l.b16 %v332
      %v389 = vunpack.c.l.b16 %v333
      %v390 = vunpack.c.l.b16 %v334
      %v391 = vunpack.c.l.b16 %v335
      %v392 = vpack.c.b16 %v385, %v384
      %v393 = vpack.c.b16 %v387, %v386
      %v394 = vpack.c.b16 %v389, %v388
      %v395 = vpack.c.b16 %v391, %v390
      %vm400 = vcmask 523264
      %v402 = vsel %vm400, %v368, 0
      %v405 = vsel %vm400, %v369, 0
      %v408 = vsel %vm400, %v370, 0
      %v411 = vsel %vm400, %v371, 0
      %v414 = vsel %vm400, %v372, 0
      %v417 = vsel %vm400, %v373, 0
      %v420 = vsel %vm400, %v374, 0
      %v423 = vsel %vm400, %v375, 0
      %425 = vmatpush.bf16.msra.mxu0 0
      %426 = vmatpush.bf16.msra.mxu0 0
      %427 = vmatpush.bf16.msra.mxu0 0
      %428 = vmatpush.bf16.msra.mxu0 0
      %429 = vmatpush.bf16.msra.mxu0 %v395
      %430 = vmatpush.bf16.msra.mxu0 %v394
      %431 = vmatpush.bf16.msra.mxu0 %v393
      %432 = vmatpush.bf16.msra.mxu0 %v392
      %433 = vmatmul.bf16.gmra.mxu0 %v402
      %v434 = vpop.f32.mrf.mxu0
      %v435 = vadd.f32 0.0, %v434
      %v436 = vpop.f32.mrf.mxu0
      %v437 = vadd.f32 0.0, %v436
      %438 = vmatmul.bf16.gmra.mxu0 %v405
      %v439 = vpop.f32.mrf.mxu0
      %v440 = vadd.f32 0.0, %v439
      %v441 = vpop.f32.mrf.mxu0
      %v442 = vadd.f32 0.0, %v441
      %443 = vmatmul.bf16.gmra.mxu0 %v408
      %v444 = vpop.f32.mrf.mxu0
      %v445 = vadd.f32 0.0, %v444
      %v446 = vpop.f32.mrf.mxu0
      %v447 = vadd.f32 0.0, %v446
      %448 = vmatmul.bf16.gmra.mxu0 %v411
      %v449 = vpop.f32.mrf.mxu0
      %v450 = vadd.f32 0.0, %v449
      %v451 = vpop.f32.mrf.mxu0
      %v452 = vadd.f32 0.0, %v451
      %453 = vmatmul.bf16.gmra.mxu0 %v414
      %v454 = vpop.f32.mrf.mxu0
      %v455 = vadd.f32 0.0, %v454
      %v456 = vpop.f32.mrf.mxu0
      %v457 = vadd.f32 0.0, %v456
      %458 = vmatmul.bf16.gmra.mxu0 %v417
      %v459 = vpop.f32.mrf.mxu0
      %v460 = vadd.f32 0.0, %v459
      %v461 = vpop.f32.mrf.mxu0
      %v462 = vadd.f32 0.0, %v461
      %463 = vmatmul.bf16.gmra.mxu0 %v420
      %v464 = vpop.f32.mrf.mxu0
      %v465 = vadd.f32 0.0, %v464
      %v466 = vpop.f32.mrf.mxu0
      %v467 = vadd.f32 0.0, %v466
      %468 = vmatmul.bf16.gmra.mxu0 %v423
      %v469 = vpop.f32.mrf.mxu0
      %v470 = vadd.f32 0.0, %v469
      %v471 = vpop.f32.mrf.mxu0
      %v472 = vadd.f32 0.0, %v471
      %473 = vdwg.mxu0
      %v490 = vunpack.c.l.b16 %v280
      %v491 = vunpack.c.l.b16 %v281
      %v492 = vunpack.c.l.b16 %v282
      %v493 = vunpack.c.l.b16 %v283
      %v494 = vunpack.c.l.b16 %v284
      %v495 = vunpack.c.l.b16 %v285
      %v496 = vunpack.c.l.b16 %v286
      %v497 = vunpack.c.l.b16 %v287
      %v498 = vunpack.c.l.b16 %v288
      %v499 = vunpack.c.l.b16 %v289
      %v500 = vunpack.c.l.b16 %v290
      %v501 = vunpack.c.l.b16 %v291
      %v502 = vunpack.c.l.b16 %v292
      %v503 = vunpack.c.l.b16 %v293
      %v504 = vunpack.c.l.b16 %v294
      %v505 = vunpack.c.l.b16 %v295
      %v506 = vpack.c.b16 %v491, %v490
      %v507 = vpack.c.b16 %v493, %v492
      %v508 = vpack.c.b16 %v495, %v494
      %v509 = vpack.c.b16 %v497, %v496
      %v510 = vpack.c.b16 %v499, %v498
      %v511 = vpack.c.b16 %v501, %v500
      %v512 = vpack.c.b16 %v503, %v502
      %v513 = vpack.c.b16 %v505, %v504
      %v538 = vunpack.c.l.b16 %v296
      %v539 = vunpack.c.l.b16 %v297
      %v540 = vunpack.c.l.b16 %v298
      %v541 = vunpack.c.l.b16 %v299
      %v542 = vunpack.c.l.b16 %v300
      %v543 = vunpack.c.l.b16 %v301
      %v544 = vunpack.c.l.b16 %v302
      %v545 = vunpack.c.l.b16 %v303
      %v546 = vunpack.c.l.b16 %v304
      %v547 = vunpack.c.l.b16 %v305
      %v548 = vunpack.c.l.b16 %v306
      %v549 = vunpack.c.l.b16 %v307
      %v550 = vunpack.c.l.b16 %v308
      %v551 = vunpack.c.l.b16 %v309
      %v552 = vunpack.c.l.b16 %v310
      %v553 = vunpack.c.l.b16 %v311
      %v554 = vpack.c.b16 %v539, %v538
      %v555 = vpack.c.b16 %v541, %v540
      %v556 = vpack.c.b16 %v543, %v542
      %v557 = vpack.c.b16 %v545, %v544
      %v558 = vpack.c.b16 %v547, %v546
      %v559 = vpack.c.b16 %v549, %v548
      %v560 = vpack.c.b16 %v551, %v550
      %v561 = vpack.c.b16 %v553, %v552
      %570 = vmatpush.bf16.msra.mxu0 %v561
      %571 = vmatpush.bf16.msra.mxu0 %v560
      %572 = vmatpush.bf16.msra.mxu0 %v559
      %573 = vmatpush.bf16.msra.mxu0 %v558
      %574 = vmatpush.bf16.msra.mxu0 %v557
      %575 = vmatpush.bf16.msra.mxu0 %v556
      %576 = vmatpush.bf16.msra.mxu0 %v555
      %577 = vmatpush.bf16.msra.mxu0 %v554
      %578 = vmatmul.bf16.gmra.mxu0 %v506
      %v579 = vpop.f32.mrf.mxu0
      %v580 = vadd.f32 %v435, %v579
      %v581 = vpop.f32.mrf.mxu0
      %v582 = vadd.f32 %v437, %v581
      %583 = vmatmul.bf16.gmra.mxu0 %v507
      %v584 = vpop.f32.mrf.mxu0
      %v585 = vadd.f32 %v440, %v584
      %v586 = vpop.f32.mrf.mxu0
      %v587 = vadd.f32 %v442, %v586
      %588 = vmatmul.bf16.gmra.mxu0 %v508
      %v589 = vpop.f32.mrf.mxu0
      %v590 = vadd.f32 %v445, %v589
      %v591 = vpop.f32.mrf.mxu0
      %v592 = vadd.f32 %v447, %v591
      %593 = vmatmul.bf16.gmra.mxu0 %v509
      %v594 = vpop.f32.mrf.mxu0
      %v595 = vadd.f32 %v450, %v594
      %v596 = vpop.f32.mrf.mxu0
      %v597 = vadd.f32 %v452, %v596
      %598 = vmatmul.bf16.gmra.mxu0 %v510
      %v599 = vpop.f32.mrf.mxu0
      %v600 = vadd.f32 %v455, %v599
      %v601 = vpop.f32.mrf.mxu0
      %v602 = vadd.f32 %v457, %v601
      %603 = vmatmul.bf16.gmra.mxu0 %v511
      %v604 = vpop.f32.mrf.mxu0
      %v605 = vadd.f32 %v460, %v604
      %v606 = vpop.f32.mrf.mxu0
      %v607 = vadd.f32 %v462, %v606
      %608 = vmatmul.bf16.gmra.mxu0 %v512
      %v609 = vpop.f32.mrf.mxu0
      %v610 = vadd.f32 %v465, %v609
      %v611 = vpop.f32.mrf.mxu0
      %v612 = vadd.f32 %v467, %v611
      %613 = vmatmul.bf16.gmra.mxu0 %v513
      %v614 = vpop.f32.mrf.mxu0
      %v615 = vadd.f32 %v470, %v614
      %v616 = vpop.f32.mrf.mxu0
      %v617 = vadd.f32 %v472, %v616
      %618 = vdwg.mxu0
      %v619 = vmax.f32 %v580, 0.0
      %v620 = vmax.f32 %v582, 0.0
      %v621 = vmax.f32 %v585, 0.0
      %v622 = vmax.f32 %v587, 0.0
      %v623 = vmax.f32 %v590, 0.0
      %v624 = vmax.f32 %v592, 0.0
      %v625 = vmax.f32 %v595, 0.0
      %v626 = vmax.f32 %v597, 0.0
      %v627 = vmax.f32 %v600, 0.0
      %v628 = vmax.f32 %v602, 0.0
      %v629 = vmax.f32 %v605, 0.0
      %v630 = vmax.f32 %v607, 0.0
      %v631 = vmax.f32 %v610, 0.0
      %v632 = vmax.f32 %v612, 0.0
      %v633 = vmax.f32 %v615, 0.0
      %v634 = vmax.f32 %v617, 0.0
      %635 = vst [vmem:[%s277] sm:$0xff] %v619
      %636 = vst [vmem:[%s277 + $0x8] sm:$0xff] %v620
      %637 = vst [vmem:[%s277 + $0x10] sm:$0xff] %v621
      %638 = vst [vmem:[%s277 + $0x18] sm:$0xff] %v622
      %639 = vst [vmem:[%s277 + $0x20] sm:$0xff] %v623
      %640 = vst [vmem:[%s277 + $0x28] sm:$0xff] %v624
      %641 = vst [vmem:[%s277 + $0x30] sm:$0xff] %v625
      %642 = vst [vmem:[%s277 + $0x38] sm:$0xff] %v626
      %643 = vst [vmem:[%s277 + $0x40] sm:$0xff] %v627
      %644 = vst [vmem:[%s277 + $0x48] sm:$0xff] %v628
      %645 = vst [vmem:[%s277 + $0x50] sm:$0xff] %v629
      %646 = vst [vmem:[%s277 + $0x58] sm:$0xff] %v630
      %647 = vst [vmem:[%s277 + $0x60] sm:$0xff] %v631
      %648 = vst [vmem:[%s277 + $0x68] sm:$0xff] %v632
      %649 = vst [vmem:[%s277 + $0x70] sm:$0xff] %v633
      %650 = vst [vmem:[%s277 + $0x78] sm:$0xff] %v634
      %s651 = smul.u32 16, %s19
      %p652 = scmp.lt.s32.totalorder %s20, 1
      %s653 = scalar_select %p652, %s20, 1
      %p654 = scmp.lt.s32.totalorder %s651, 31
      %s655 = scalar_select %p654, %s651, 31
      %s656 = smul.addr %s653, 32
      %s657 = sadd.s32 %s655, %s656
      %s658 = smul.addr %s657, 8
      %s659 = scalar_lea.vmem %s4, %s658
      // Predicated region
      $region37: #{_lambda_.1} parent=35 // pred_check
        %p660 = pneg %p148
      $region38: #{_lambda_.1} parent=35 // pred_check_branch
        %662 = sbr.rel (%p660) target = $region40
      $region39: #{_lambda_.1} parent=35 // pred_region
        %s663 = smul.u32 16, %s19
      $region40: #{_lambda_.1} parent=35 // pred_fallthru
        _
    $region36: #{_lambda_.1} parent=5 // pred_fallthru
      _
    %p664 = scmp.le.s32.totalorder 2, %s10
    // Predicated region
    $region41: #{_lambda_.1} parent=5 // pred_check
      %p665 = pneg %p664
    $region42: #{_lambda_.1} parent=5 // pred_check_branch
      %667 = sbr.rel (%p665) target = $region44
    $region43: #{_lambda_.1} parent=5 // pred_region
      %s668 = ssub.s32 %s10, 2
      // Predicated region
      $region45: #{_lambda_.1} parent=43 // pred_check
        %p669 = pneg %p154
      $region46: #{_lambda_.1} parent=43 // pred_check_branch
        %671 = sbr.rel (%p669) target = $region48
      $region47: #{_lambda_.1} parent=43 // pred_region
        %s672 = smul.u32 16, %s21
        %p673 = scmp.lt.s32.totalorder %s22, 1
        %s674 = scalar_select %p673, %s22, 1
        %p675 = scmp.lt.s32.totalorder %s672, 31
        %s676 = scalar_select %p675, %s672, 31
        %s677 = smul.addr %s674, 32
        %s678 = sadd.s32 %s676, %s677
        %s679 = smul.addr %s678, 8
        %s680 = scalar_lea.vmem %s4, %s679
      $region48: #{_lambda_.1} parent=43 // pred_fallthru
        _
    $region44: #{_lambda_.1} parent=5 // pred_fallthru
      _
  $region6: #{_lambda_.1} parent=0 // loop_footer
    %s14 = sadd.s32 1, %s10
  $region7: #{_lambda_.1} parent=0 // loop_footer_branch
    %9 = sbr.rel target = $region3
  $region8: #{_lambda_.1} parent=0 // loop_exit
    _

</llo_original>
